<compile_context>
chip_gen: v6e
topology: v6e:2x2x1
jax: 0.10.0
libtpu: 0.0.40
codegen_flags: <defaults>
</compile_context>

<pallas_src>
import jax
import jax.numpy as jnp
from jax.experimental import pallas as pl
from jax.experimental.pallas import tpu as pltpu

EPS_IN = 1e-5     # nn.InstanceNorm2d default eps
EPS_LN = 1e-5     # nn.LayerNorm default eps
NEG_BIG = -1e30   # "minus infinity" that stays NaN-free under exp()


def _round_up(n, m):
    return ((n + m - 1) // m) * m


def _vmem_budget_bytes():
    """Generation-aware scoped-VMEM budget (half of physical, capped 64 MiB)."""
    try:
        cap = int(pltpu.get_tpu_info().vmem_capacity_bytes)
    except Exception:
        cap = 64 * 1024 * 1024          # conservative fallback
    return int(min(cap // 2, 64 * 1024 * 1024))


# --------------------------------------------------------------------------
# Shared epilogue: tiny channel_mul MLP + fused InstanceNorm/blend affine
# --------------------------------------------------------------------------
def _mask_and_affine(ctx, mu, rstd, wa_ref, wb_ref, vp_ref):
    """Returns (a, b) with  out = a*x + b  ==  x*mask + (1-mask)*(x-mu)*rstd."""
    n_ch = vp_ref.shape[0]
    # channel_mul_conv: Conv1x1 -> LayerNorm -> ReLU -> Conv1x1 -> sigmoid
    w1 = wa_ref[1:1 + n_ch, :]                                    # (Ch, C)
    b1 = vp_ref[:, 0:1]
    gamma = vp_ref[:, 1:2]
    beta = vp_ref[:, 2:3]
    h = jnp.dot(w1, ctx, preferred_element_type=jnp.float32) + b1  # (Ch, 1)
    mu_h = jnp.mean(h)
    var_h = jnp.maximum(jnp.mean(h * h) - mu_h * mu_h, 0.0)       # clamp (f32 cancel)
    h = (h - mu_h) * jax.lax.rsqrt(var_h + EPS_LN) * gamma + beta
    h = jnp.maximum(h, 0.0)

    w2 = wb_ref[:, 0:n_ch]                                        # (C, Ch)
    b2 = wb_ref[:, n_ch:n_ch + 1]                                 # (C, 1)
    mlog = jnp.dot(w2, h, preferred_element_type=jnp.float32) + b2
    mask = jax.nn.sigmoid(mlog)                                   # (C, 1)

    om = (1.0 - mask) * rstd
    a = mask + om
    b = -om * mu
    return a, b


# --------------------------------------------------------------------------
# Fused single-pass kernel: whole (C, HW) slab of one batch resident in VMEM
# --------------------------------------------------------------------------
def _make_fused_kernel(hw, hw_blk):
    inv_hw = 1.0 / float(hw)
    mask_needed = hw_blk != hw          # ragged lanes beyond HW hold garbage

    def kernel(x_ref, wa_ref, wb_ref, vp_ref, o_ref):
        x = x_ref[0].astype(jnp.float32)                           # (C, hw_blk)
        if mask_needed:
            lane = jax.lax.broadcasted_iota(jnp.int32, (1, hw_blk), 1)
            valid = lane < hw
            x = jnp.where(valid, x, 0.0)                           # zero ragged lanes

        wm = wa_ref[0:1, :]                                        # (1, C)
        # conv_mask 1x1: bias dropped (softmax shift invariance).
        logits = jnp.dot(wm, x, preferred_element_type=jnp.float32)   # (1, hw_blk)
        if mask_needed:
            logits = jnp.where(valid, logits, NEG_BIG)

        m = jnp.max(logits, axis=-1, keepdims=True)
        p = jnp.exp(logits - m)                                    # (1, hw_blk)
        denom = jnp.sum(p, axis=-1, keepdims=True)                 # (1, 1)

        # All (C, HW) lane reductions on the MXU (VPU/XLU stay free).
        ones_row = jnp.ones_like(p)
        rhs = jnp.concatenate([p, ones_row], axis=0)               # (2, hw_blk)
        red = jax.lax.dot_general(                                  # (C, 2) = [x@p, sum x]
            x, rhs, (((1,), (1,)), ((), ())),
            preferred_element_type=jnp.float32)
        sx2 = jax.lax.dot_general(                                  # (C, 1) = sum x^2
            x * x, ones_row, (((1,), (1,)), ((), ())),
            preferred_element_type=jnp.float32)

        ctx = red[:, 0:1] / denom                                   # softmax-weighted ctx
        mu = red[:, 1:2] * inv_hw
        var = jnp.maximum(sx2 * inv_hw - mu * mu, 0.0)              # clamp (f32 cancel)
        rstd = jax.lax.rsqrt(var + EPS_IN)

        a, b = _mask_and_affine(ctx, mu, rstd, wa_ref, wb_ref, vp_ref)
        # Ragged output lanes are clipped by the writeback DMA automatically.
        o_ref[0] = (x * a + b).astype(o_ref.dtype)

    return kernel


# --------------------------------------------------------------------------
# Fallback pass 1: per-batch statistics -> fused per-channel affine coeffs
# --------------------------------------------------------------------------
def _make_stats_kernel(hw, tile_hw):
    inv_hw = 1.0 / float(hw)
    mask_needed = (hw % tile_hw) != 0

    def kernel(x_ref, wa_ref, wb_ref, vp_ref, coef_ref,
               ctx_sc, sumx_sc, sumx2_sc, m_sc, sump_sc):
        t = pl.program_id(1)
        nt = pl.num_programs(1)

        @pl.when(t == 0)
        def _():
            m_sc[...] = jnp.full_like(m_sc, NEG_BIG)
            sump_sc[...] = jnp.zeros_like(sump_sc)
            ctx_sc[...] = jnp.zeros_like(ctx_sc)
            sumx_sc[...] = jnp.zeros_like(sumx_sc)
            sumx2_sc[...] = jnp.zeros_like(sumx2_sc)

        x = x_ref[0].astype(jnp.float32)                           # (C, T)
        if mask_needed:
            # Last (partial) tile: lanes >= HW hold garbage -> zero them so
            # sum(x), sum(x^2) and the ctx dot stay correct.
            lane = jax.lax.broadcasted_iota(jnp.int32, (1, tile_hw), 1)
            valid = lane < (hw - t * tile_hw)
            x = jnp.where(valid, x, 0.0)

        wm = wa_ref[0:1, :]                                        # (1, C)
        logits = jnp.dot(wm, x, preferred_element_type=jnp.float32)   # (1, T)
        if mask_needed:
            valid_l = lane < (hw - t * tile_hw)
            logits = jnp.where(valid_l, logits, NEG_BIG)

        # ---- online softmax statistics across HW tiles ----
        m_old = m_sc[...]
        m_new = jnp.maximum(m_old, jnp.max(logits, axis=-1, keepdims=True))
        alpha = jnp.exp(m_old - m_new)
        p = jnp.exp(logits - m_new)                                # (1, T)

        # ---- all (C, T) lane reductions on the MXU ----
        ones_row = jnp.ones_like(p)
        rhs = jnp.concatenate([p, ones_row], axis=0)               # (2, T)
        red = jax.lax.dot_general(                                  # (C, 2)
            x, rhs, (((1,), (1,)), ((), ())),
            preferred_element_type=jnp.float32)
        sx2 = jax.lax.dot_general(                                  # (C, 1)
            x * x, ones_row, (((1,), (1,)), ((), ())),
            preferred_element_type=jnp.float32)

        ctx_sc[...] = ctx_sc[...] * alpha + red[:, 0:1]
        sumx_sc[...] = sumx_sc[...] + red[:, 1:2]
        sumx2_sc[...] = sumx2_sc[...] + sx2
        sump_sc[...] = sump_sc[...] * alpha + jnp.sum(p, axis=-1, keepdims=True)
        m_sc[...] = m_new

        @pl.when(t == nt - 1)
        def _():
            ctx = ctx_sc[...] / sump_sc[...]                       # (C, 1)
            mu = sumx_sc[...] * inv_hw
            var = jnp.maximum(sumx2_sc[...] * inv_hw - mu * mu, 0.0)
            rstd = jax.lax.rsqrt(var + EPS_IN)
            a, b = _mask_and_affine(ctx, mu, rstd, wa_ref, wb_ref, vp_ref)
            coef_ref[0] = jnp.concatenate([a, b], axis=1)          # (C, 2)

    return kernel


# --------------------------------------------------------------------------
# Fallback pass 2: lane-dense blend, 2 VPU ops per element
# --------------------------------------------------------------------------
def _blend_kernel(x_ref, coef_ref, o_ref):
    cf = coef_ref[0]                          # (C, 2)
    a = cf[:, 0:1]                            # broadcast over lanes
    b = cf[:, 1:2]
    o_ref[0] = (x_ref[0].astype(jnp.float32) * a + b).astype(o_ref.dtype)


def _pick_tile_hw(hw_pad, c, in_item, out_item, budget):
    """Largest multiple of 128 in [128, 2048] whose pass-2 working set fits."""
    per_lane = 2 * c * (in_item + out_item)    # double-buffered in + out per lane
    cap = max(int(0.5 * budget), 512 * 1024)
    t = min(2048, hw_pad)
    while t > 128 and t * per_lane > cap:
        t -= 128
    return max(t, 128)


# --------------------------------------------------------------------------
# Wrapper
# --------------------------------------------------------------------------
def context_block_2d(x, params, *, tile_hw=None, force_two_pass=False):
    """x: (B, C, H, W); params: dict of reshaped 1x1-conv weights."""
    B, C, H, W = x.shape
    HW = H * W
    Ch = params["w1"].shape[0]

    x2 = x.reshape(B, C, HW)                  # no host-side pad, no dtype cast
    HW_pad = _round_up(HW, 128)

    # Pack the tiny parameter tensors into 3 resident arrays (fewer DMAs).
    # conv_mask bias dropped on purpose (softmax shift invariance).
    wa = jnp.concatenate([params["wm"], params["w1"]], axis=0).astype(jnp.float32)  # (1+Ch, C)
    wb = jnp.concatenate([params["w2"], params["b2"]], axis=1).astype(jnp.float32)  # (C, Ch+1)
    vp = jnp.concatenate([params["b1"], params["gamma"], params["beta"]],
                         axis=1).astype(jnp.float32)                                # (Ch, 3)

    budget = _vmem_budget_bytes()
    in_item = x2.dtype.itemsize
    out_item = in_item
    slab_bytes = C * HW_pad * (in_item + out_item)          # one in + one out block
    param_bytes = (wa.size + wb.size + vp.size) * 4

    param_specs = [
        pl.BlockSpec((1 + Ch, C), lambda *_: (0, 0)),
        pl.BlockSpec((C, Ch + 1), lambda *_: (0, 0)),
        pl.BlockSpec((Ch, 3), lambda *_: (0, 0)),
    ]

    use_fused = (not force_two_pass) and \
        (2 * slab_bytes + param_bytes <= int(0.7 * budget))

    if use_fused:
        # ---- single pass: x read once, written once ----
        out = pl.pallas_call(
            _make_fused_kernel(HW, HW_pad),
            out_shape=jax.ShapeDtypeStruct((B, C, HW), x2.dtype),
            grid_spec=pltpu.PrefetchScalarGridSpec(
                num_scalar_prefetch=0,
                grid=(B,),
                in_specs=[pl.BlockSpec((1, C, HW_pad), lambda b: (b, 0, 0))]
                         + param_specs,
                out_specs=pl.BlockSpec((1, C, HW_pad), lambda b: (b, 0, 0)),
            ),
            compiler_params=pltpu.CompilerParams(
                dimension_semantics=("parallel",),
                vmem_limit_bytes=budget),
        )(x2, wa, wb, vp)
        return out.reshape(B, C, H, W)

    # ---- fallback: two passes over HW tiles ----
    if tile_hw is None:
        tile_hw = _pick_tile_hw(HW_pad, C, in_item, out_item, budget)
    assert tile_hw % 128 == 0
    nT = (HW + tile_hw - 1) // tile_hw

    coef = pl.pallas_call(
        _make_stats_kernel(HW, tile_hw),
        out_shape=jax.ShapeDtypeStruct((B, C, 2), jnp.float32),
        grid_spec=pltpu.PrefetchScalarGridSpec(
            num_scalar_prefetch=0,
            grid=(B, nT),
            in_specs=[pl.BlockSpec((1, C, tile_hw), lambda b, t: (b, 0, t))]
                     + param_specs,
            out_specs=pl.BlockSpec((1, C, 2), lambda b, t: (b, 0, 0)),
            scratch_shapes=[
                pltpu.VMEM((C, 1), jnp.float32),   # ctx accumulator
                pltpu.VMEM((C, 1), jnp.float32),   # sum x
                pltpu.VMEM((C, 1), jnp.float32),   # sum x^2
                pltpu.VMEM((1, 1), jnp.float32),   # running softmax max
                pltpu.VMEM((1, 1), jnp.float32),   # running softmax denom
            ]),
        compiler_params=pltpu.CompilerParams(
            dimension_semantics=("parallel", "arbitrary"),
            vmem_limit_bytes=budget),
    )(x2, wa, wb, vp)

    out = pl.pallas_call(
        _blend_kernel,
        out_shape=jax.ShapeDtypeStruct((B, C, HW), x2.dtype),
        grid_spec=pltpu.PrefetchScalarGridSpec(
            num_scalar_prefetch=0,
            grid=(B, nT),
            in_specs=[
                pl.BlockSpec((1, C, tile_hw), lambda b, t: (b, 0, t)),
                pl.BlockSpec((1, C, 2), lambda b, t: (b, 0, 0)),
            ],
            out_specs=pl.BlockSpec((1, C, tile_hw), lambda b, t: (b, 0, t)),
        ),
        compiler_params=pltpu.CompilerParams(
            dimension_semantics=("parallel", "parallel"),
            vmem_limit_bytes=budget),
    )(x2, coef)

    return out.reshape(B, C, H, W)


# --------------------------------------------------------------------------
# Pure-JAX reference mirroring the PyTorch forward (keeps the conv_mask bias)
# --------------------------------------------------------------------------
def _reference(x, p):
    B, C, H, W = x.shape
    HW = H * W
    x2 = x.reshape(B, C, HW).astype(jnp.float32)
    logits = jnp.einsum("c,bch->bh", p["wm"][0], x2) + p["bm"][0, 0]
    sm = jax.nn.softmax(logits, axis=-1)                            # (B, HW)
    ctx = jnp.einsum("bch,bh->bc", x2, sm)                          # (B, C)
    h = ctx @ p["w1"].T + p["b1"][:, 0]                             # (B, Ch)
    mu = h.mean(-1, keepdims=True)
    var = ((h - mu) ** 2).mean(-1, keepdims=True)
    h = (h - mu) / jnp.sqrt(var + EPS_LN) * p["gamma"][:, 0] + p["beta"][:, 0]
    h = jnp.maximum(h, 0.0)
    mask = jax.nn.sigmoid(h @ p["w2"].T + p["b2"][:, 0])            # (B, C)
    mu_c = x2.mean(-1, keepdims=True)
    var_c = ((x2 - mu_c) ** 2).mean(-1, keepdims=True)
    xn = (x2 - mu_c) / jnp.sqrt(var_c + EPS_IN)
    out = x2 * mask[:, :, None] + (1.0 - mask[:, :, None]) * xn
    return out.reshape(B, C, H, W)


def _make_params(key, C):
    Ch = C // 16
    k = jax.random.split(key, 6)
    return {
        "wm": jax.random.normal(k[0], (1, C), jnp.float32) * 0.1,     # Conv2d(C,1,1)
        "bm": jax.random.normal(k[1], (1, 1), jnp.float32) * 0.1,
        "w1": jax.random.normal(k[2], (Ch, C), jnp.float32) * 0.1,    # Conv2d(C,Ch,1)
        "b1": jax.random.normal(k[3], (Ch, 1), jnp.float32) * 0.1,
        "gamma": jnp.ones((Ch, 1), jnp.float32),                      # LayerNorm
        "beta": jnp.zeros((Ch, 1), jnp.float32),
        "w2": jax.random.normal(k[4], (C, Ch), jnp.float32) * 0.1,    # Conv2d(Ch,C,1)
        "b2": jax.random.normal(k[5], (C, 1), jnp.float32) * 0.1,
    }


if __name__ == "__main__":
    key = jax.random.PRNGKey(0)
    kp, kx1, kx2, kx3 = jax.random.split(key, 4)

    # dim must be >= 16 so that dim // 16 >= 1 (as in the PyTorch module).
    C = 32
    params = _make_params(kp, C)

    # Case 1: HW multiple of 128 -> fused single-pass kernel.
    x1 = jax.random.normal(kx1, (2, C, 16, 16), jnp.float32)
    out1 = jax.block_until_ready(context_block_2d(x1, params))
    ref1 = _reference(x1, params)
    assert out1.shape == x1.shape
    assert jnp.allclose(out1, ref1, atol=1e-3, rtol=1e-3), "mismatch (fused, aligned)"

    # Case 2: ragged HW = 81 -> fused kernel with in-kernel lane masking.
    x2_in = jax.random.normal(kx2, (2, C, 9, 9), jnp.float32)
    out2 = jax.block_until_ready(context_block_2d(x2_in, params))
    ref2 = _reference(x2_in, params)
    assert out2.shape == x2_in.shape
    assert jnp.allclose(out2, ref2, atol=1e-3, rtol=1e-3), "mismatch (fused, ragged)"

    # Case 3: two-pass fallback, aligned: HW=256, tile=128 -> online softmax
    # across 2 tiles.
    out3 = jax.block_until_ready(
        context_block_2d(x1, params, tile_hw=128, force_two_pass=True))
    assert jnp.allclose(out3, ref1, atol=1e-3, rtol=1e-3), "mismatch (2-pass, aligned)"

    # Case 4: two-pass fallback, ragged: HW=225, tile=128 -> nT=2 with a
    # partial last tile (exercises the in-kernel zero/-inf masking).
    x3 = jax.random.normal(kx3, (2, C, 15, 15), jnp.float32)
    out4 = jax.block_until_ready(
        context_block_2d(x3, params, tile_hw=128, force_two_pass=True))
    ref4 = _reference(x3, params)
    assert jnp.allclose(out4, ref4, atol=1e-3, rtol=1e-3), "mismatch (2-pass, ragged)"

    print("KERNEL_OK")
</pallas_src>

<mosaic_0001>
module attributes {stable_mosaic.version = 11 : i64} {
  func.func @kernel(%arg0: i32, %arg1: memref<1x32x256xf32, #tpu.memory_space<vmem>>, %arg2: memref<3x32xf32, #tpu.memory_space<vmem>>, %arg3: memref<32x3xf32, #tpu.memory_space<vmem>>, %arg4: memref<2x3xf32, #tpu.memory_space<vmem>>, %arg5: memref<1x32x256xf32, #tpu.memory_space<vmem>>) attributes {dimension_semantics = [#tpu.dimension_semantics<parallel>], iteration_bounds = array<i64: 2>, scalar_prefetch = 0 : i64, scratch_operands = 0 : i64, tpu.core_type = #tpu.core_type<tc>, window_params = [{transform_indices = @transform_0, window_bounds = array<i64: 1, 32, 256>}, {pipeline_mode = #tpu.pipeline_mode<synchronous>, transform_indices = @transform_1, window_bounds = array<i64: 3, 32>}, {pipeline_mode = #tpu.pipeline_mode<synchronous>, transform_indices = @transform_2, window_bounds = array<i64: 32, 3>}, {pipeline_mode = #tpu.pipeline_mode<synchronous>, transform_indices = @transform_3, window_bounds = array<i64: 2, 3>}, {transform_indices = @transform_4, window_bounds = array<i64: 1, 32, 256>}]} {
    %c0 = arith.constant 0 : index
    %c0_0 = arith.constant 0 : index
    %c0_1 = arith.constant 0 : index
    %0 = vector.load %arg1[%c0, %c0_0, %c0_1] : memref<1x32x256xf32, #tpu.memory_space<vmem>>, vector<1x32x256xf32>
    %1 = vector.shape_cast %0 : vector<1x32x256xf32> to vector<32x256xf32>
    %c0_2 = arith.constant 0 : index
    %c0_3 = arith.constant 0 : index
    %2 = vector.load %arg2[%c0_2, %c0_3] : memref<3x32xf32, #tpu.memory_space<vmem>>, vector<1x32xf32>
    %cst = arith.constant dense<0.000000e+00> : vector<1x256xf32>
    %3 = tpu.matmul %2, %1, %cst {dimension_numbers = #tpu.dot_dimension_numbers<[1], [0], [0], [1], [0, 0, 1, 1], [], []>} : vector<1x32xf32>, vector<32x256xf32>, vector<1x256xf32> -> vector<1x256xf32>
    %cst_4 = arith.constant dense<0xFF800000> : vector<1xf32>
    %4 = vector.multi_reduction <maximumf>, %3, %cst_4 [1] : vector<1x256xf32> to vector<1xf32>
    %5 = vector.shape_cast %4 : vector<1xf32> to vector<1x1xf32>
    %6 = vector.broadcast %5 : vector<1x1xf32> to vector<1x256xf32>
    %7 = arith.subf %3, %6 : vector<1x256xf32>
    %8 = math.exp %7 : vector<1x256xf32>
    %cst_5 = arith.constant dense<0.000000e+00> : vector<1xf32>
    %9 = vector.multi_reduction <add>, %8, %cst_5 [1] : vector<1x256xf32> to vector<1xf32>
    %10 = vector.shape_cast %9 : vector<1xf32> to vector<1x1xf32>
    %cst_6 = arith.constant 1.000000e+00 : f32
    %11 = vector.broadcast %cst_6 : f32 to vector<1x256xf32>
    %12 = tpu.concatenate %8, %11 in 0 : vector<1x256xf32>, vector<1x256xf32> -> vector<2x256xf32>
    %cst_7 = arith.constant dense<0.000000e+00> : vector<32x2xf32>
    %13 = tpu.matmul %1, %12, %cst_7 {dimension_numbers = #tpu.dot_dimension_numbers<[1], [1], [0], [0], [0, 0, 1, 0], [], []>} : vector<32x256xf32>, vector<2x256xf32>, vector<32x2xf32> -> vector<32x2xf32>
    %14 = arith.mulf %1, %1 : vector<32x256xf32>
    %cst_8 = arith.constant dense<0.000000e+00> : vector<32x1xf32>
    %15 = tpu.matmul %14, %11, %cst_8 {dimension_numbers = #tpu.dot_dimension_numbers<[1], [1], [0], [0], [0, 0, 1, 0], [], []>} : vector<32x256xf32>, vector<1x256xf32>, vector<32x1xf32> -> vector<32x1xf32>
    %16 = vector.extract_strided_slice %13 {offsets = [0, 0], sizes = [32, 1], strides = [1, 1]} : vector<32x2xf32> to vector<32x1xf32>
    %17 = vector.broadcast %10 : vector<1x1xf32> to vector<32x1xf32>
    %18 = arith.divf %16, %17 : vector<32x1xf32>
    %19 = vector.extract_strided_slice %13 {offsets = [0, 1], sizes = [32, 1], strides = [1, 1]} : vector<32x2xf32> to vector<32x1xf32>
    %cst_9 = arith.constant 3.906250e-03 : f32
    %20 = vector.broadcast %cst_9 : f32 to vector<32x1xf32>
    %21 = arith.mulf %19, %20 : vector<32x1xf32>
    %cst_10 = arith.constant 3.906250e-03 : f32
    %22 = vector.broadcast %cst_10 : f32 to vector<32x1xf32>
    %23 = arith.mulf %15, %22 : vector<32x1xf32>
    %24 = arith.mulf %21, %21 : vector<32x1xf32>
    %25 = arith.subf %23, %24 : vector<32x1xf32>
    %cst_11 = arith.constant 0.000000e+00 : f32
    %26 = vector.broadcast %cst_11 : f32 to vector<32x1xf32>
    %27 = arith.maximumf %25, %26 : vector<32x1xf32>
    %cst_12 = arith.constant 9.99999974E-6 : f32
    %28 = vector.broadcast %cst_12 : f32 to vector<32x1xf32>
    %29 = arith.addf %27, %28 : vector<32x1xf32>
    %30 = math.rsqrt %29 : vector<32x1xf32>
    %c1 = arith.constant 1 : index
    %c0_13 = arith.constant 0 : index
    %31 = vector.load %arg2[%c1, %c0_13] : memref<3x32xf32, #tpu.memory_space<vmem>>, vector<2x32xf32>
    %c0_14 = arith.constant 0 : index
    %c0_15 = arith.constant 0 : index
    %32 = vector.load %arg4[%c0_14, %c0_15] : memref<2x3xf32, #tpu.memory_space<vmem>>, vector<2x1xf32>
    %c0_16 = arith.constant 0 : index
    %c1_17 = arith.constant 1 : index
    %33 = vector.load %arg4[%c0_16, %c1_17] : memref<2x3xf32, #tpu.memory_space<vmem>>, vector<2x1xf32>
    %c0_18 = arith.constant 0 : index
    %c2 = arith.constant 2 : index
    %34 = vector.load %arg4[%c0_18, %c2] : memref<2x3xf32, #tpu.memory_space<vmem>>, vector<2x1xf32>
    %cst_19 = arith.constant dense<0.000000e+00> : vector<2x1xf32>
    %35 = tpu.matmul %31, %18, %cst_19 {dimension_numbers = #tpu.dot_dimension_numbers<[1], [0], [0], [1], [0, 0, 1, 1], [], []>} : vector<2x32xf32>, vector<32x1xf32>, vector<2x1xf32> -> vector<2x1xf32>
    %36 = arith.addf %35, %32 : vector<2x1xf32>
    %37 = vector.shape_cast %36 : vector<2x1xf32> to vector<1x2x1xf32>
    %cst_20 = arith.constant dense<0.000000e+00> : vector<1xf32>
    %38 = vector.multi_reduction <add>, %37, %cst_20 [1, 2] : vector<1x2x1xf32> to vector<1xf32>
    %39 = vector.shape_cast %38 : vector<1xf32> to vector<1x1x1xf32>
    %40 = vector.extract %39[0, 0, 0] : f32 from vector<1x1x1xf32>
    %cst_21 = arith.constant 2.000000e+00 : f32
    %41 = arith.divf %40, %cst_21 : f32
    %42 = arith.mulf %36, %36 : vector<2x1xf32>
    %43 = vector.shape_cast %42 : vector<2x1xf32> to vector<1x2x1xf32>
    %cst_22 = arith.constant dense<0.000000e+00> : vector<1xf32>
    %44 = vector.multi_reduction <add>, %43, %cst_22 [1, 2] : vector<1x2x1xf32> to vector<1xf32>
    %45 = vector.shape_cast %44 : vector<1xf32> to vector<1x1x1xf32>
    %46 = vector.extract %45[0, 0, 0] : f32 from vector<1x1x1xf32>
    %cst_23 = arith.constant 2.000000e+00 : f32
    %47 = arith.divf %46, %cst_23 : f32
    %48 = arith.mulf %41, %41 : f32
    %49 = arith.subf %47, %48 : f32
    %cst_24 = arith.constant 0.000000e+00 : f32
    %50 = arith.maximumf %49, %cst_24 : f32
    %51 = vector.broadcast %41 : f32 to vector<2x1xf32>
    %52 = arith.subf %36, %51 : vector<2x1xf32>
    %cst_25 = arith.constant 9.99999974E-6 : f32
    %53 = arith.addf %50, %cst_25 : f32
    %54 = math.rsqrt %53 : f32
    %55 = vector.broadcast %54 : f32 to vector<2x1xf32>
    %56 = arith.mulf %52, %55 : vector<2x1xf32>
    %57 = arith.mulf %56, %33 : vector<2x1xf32>
    %58 = arith.addf %57, %34 : vector<2x1xf32>
    %cst_26 = arith.constant 0.000000e+00 : f32
    %59 = vector.broadcast %cst_26 : f32 to vector<2x1xf32>
    %60 = arith.maximumf %58, %59 : vector<2x1xf32>
    %c0_27 = arith.constant 0 : index
    %c0_28 = arith.constant 0 : index
    %61 = vector.load %arg3[%c0_27, %c0_28] : memref<32x3xf32, #tpu.memory_space<vmem>>, vector<32x2xf32>
    %c0_29 = arith.constant 0 : index
    %c2_30 = arith.constant 2 : index
    %62 = vector.load %arg3[%c0_29, %c2_30] : memref<32x3xf32, #tpu.memory_space<vmem>>, vector<32x1xf32>
    %cst_31 = arith.constant dense<0.000000e+00> : vector<32x1xf32>
    %63 = tpu.matmul %61, %60, %cst_31 {dimension_numbers = #tpu.dot_dimension_numbers<[1], [0], [0], [1], [0, 0, 1, 1], [], []>} : vector<32x2xf32>, vector<2x1xf32>, vector<32x1xf32> -> vector<32x1xf32>
    %64 = arith.addf %63, %62 : vector<32x1xf32>
    %65 = arith.negf %64 : vector<32x1xf32>
    %66 = math.exp %65 : vector<32x1xf32>
    %cst_32 = arith.constant 1.000000e+00 : f32
    %67 = vector.broadcast %cst_32 : f32 to vector<32x1xf32>
    %68 = arith.addf %67, %66 : vector<32x1xf32>
    %69 = arith.divf %67, %68 : vector<32x1xf32>
    %cst_33 = arith.constant 1.000000e+00 : f32
    %70 = vector.broadcast %cst_33 : f32 to vector<32x1xf32>
    %71 = arith.subf %70, %69 : vector<32x1xf32>
    %72 = arith.mulf %71, %30 : vector<32x1xf32>
    %73 = arith.addf %69, %72 : vector<32x1xf32>
    %cst_34 = arith.constant 0.000000e+00 : f32
    %74 = vector.broadcast %cst_34 : f32 to vector<32x1xf32>
    %75 = arith.subf %74, %72 : vector<32x1xf32>
    %76 = arith.mulf %75, %21 : vector<32x1xf32>
    %77 = vector.broadcast %73 : vector<32x1xf32> to vector<32x256xf32>
    %78 = arith.mulf %1, %77 : vector<32x256xf32>
    %79 = vector.broadcast %76 : vector<32x1xf32> to vector<32x256xf32>
    %80 = arith.addf %78, %79 : vector<32x256xf32>
    %c0_35 = arith.constant 0 : index
    %c0_36 = arith.constant 0 : index
    %c0_37 = arith.constant 0 : index
    %81 = vector.load %arg5[%c0_35, %c0_36, %c0_37] : memref<1x32x256xf32, #tpu.memory_space<vmem>>, vector<1x32x256xf32>
    %82 = vector.shape_cast %81 : vector<1x32x256xf32> to vector<32x256xf32>
    %83 = vector.shape_cast %80 : vector<32x256xf32> to vector<1x32x256xf32>
    tpu.vector_store %arg5[%c0_35, %c0_36, %c0_37], %83 {strides = array<i32>} : memref<1x32x256xf32, #tpu.memory_space<vmem>>, vector<1x32x256xf32>,
    return
  }
  func.func @transform_0(%arg0: i32) -> (i32, i32, i32) {
    %c0_i32 = arith.constant 0 : i32
    %c0_i32_0 = arith.constant 0 : i32
    %c0_i32_1 = arith.constant 0 : i32
    return %arg0, %c0_i32, %c0_i32_0 : i32, i32, i32
  }
  func.func @transform_1(%arg0: i32) -> (i32, i32) {
    %c0_i32 = arith.constant 0 : i32
    %c0_i32_0 = arith.constant 0 : i32
    %c0_i32_1 = arith.constant 0 : i32
    return %c0_i32, %c0_i32_0 : i32, i32
  }
  func.func @transform_2(%arg0: i32) -> (i32, i32) {
    %c0_i32 = arith.constant 0 : i32
    %c0_i32_0 = arith.constant 0 : i32
    %c0_i32_1 = arith.constant 0 : i32
    return %c0_i32, %c0_i32_0 : i32, i32
  }
  func.func @transform_3(%arg0: i32) -> (i32, i32) {
    %c0_i32 = arith.constant 0 : i32
    %c0_i32_0 = arith.constant 0 : i32
    %c0_i32_1 = arith.constant 0 : i32
    return %c0_i32, %c0_i32_0 : i32, i32
  }
  func.func @transform_4(%arg0: i32) -> (i32, i32, i32) {
    %c0_i32 = arith.constant 0 : i32
    %c0_i32_0 = arith.constant 0 : i32
    %c0_i32_1 = arith.constant 0 : i32
    return %arg0, %c0_i32, %c0_i32_0 : i32, i32, i32
  }
}

</mosaic_0001>

<llo_original>
// kernel: tpu_custom_call.1
$region0: #{tpu_custom_call.1}
  #allocation0 [shape = 'u32[]', space=smem, size = 0x4, offset = 0x4, fixed_abs, tag = 'smem constant byte address 0x4 - core index']
  #allocation1 [shape = 'u32[144,128]{1,0:T(1,128)}', space=vmem, size = 0x12000, scoped, tag = 'internal scratch']
  %s0 = inlined_call_operand.hbm [shape: f32[2,32,256], index: 0, kind: input, shape index: {}]
  %s1 = inlined_call_operand.vmem [shape: f32[3,32], index: 1, kind: input, shape index: {}]
  %s2 = inlined_call_operand.vmem [shape: f32[32,3], index: 2, kind: input, shape index: {}]
  %s3 = inlined_call_operand.vmem [shape: f32[2,3], index: 3, kind: input, shape index: {}]
  %s4 = inlined_call_operand.hbm [shape: f32[2,32,256], index: 4, kind: output, shape index: {}]
  %s5 = sld [smem:[#allocation0]]
  $region53: #{tpu_custom_call.1} parent=0
    _
  %s7 = ssub.s32 1, %s5
  %s8 = scalar_select 0, %s7, %s5
  $region1: #{tpu_custom_call.1} parent=0
    #allocation2 [shape = 'u8[65536]{0}', space=vmem, size = 0x10000, scoped, tag = 'input window, operand 0']
    #allocation3 [shape = 's32[2]{0}', space=sflag, size = 0x8, scoped, tag = 'scoped memory for tpu_custom_call.1']
    #allocation4 [shape = 's32[2]{0}', space=sflag, size = 0x8, scoped, tag = 'scoped memory for tpu_custom_call.1']
    #allocation5 [shape = 'u8[65536]{0}', space=vmem, size = 0x10000, scoped, tag = 'output window, operand 0']
    %9 = vsyncpa [#allocation3], 0
    %s10 = scalar_lea.sflag [#allocation3], 1
    %11 = vsyncpa %s10, 0
    %12 = vsyncpa [#allocation4], 0
    %s13 = scalar_lea.sflag [#allocation4], 1
    %14 = vsyncpa %s13, 0
    loop: start=0, step=1, limit=4
    $region2: #{tpu_custom_call.1} parent=1 // loop_pre_header
      _
    $region3: #{tpu_custom_call.1} parent=1 // loop_header
      %s16 = sphi 0, %s20
      %p17 = scmp.ge.s32.totalorder %s16, 4
      %s26 = sphi 0, %s28
      %s29 = sphi 0, %s26
      %s30 = sphi 0, %s29
      %s46 = sphi 0, %s30
      %s50 = sphi 0, %s50
      %s52 = sphi 0, %s50
      %s53 = sphi 0, %s52
      %s67 = sphi 0, %s53
      %s71 = sphi 0, %s71
      %s73 = sphi 0, %s71
      %s74 = sphi 0, %s73
      %s88 = sphi 0, %s74
      %s92 = sphi 0, %s92
      %s94 = sphi 0, %s92
      %s95 = sphi 0, %s94
      %s109 = sphi 0, %s95
      %s115 = sphi 0, %s117
      %s118 = sphi 0, %s115
      %s119 = sphi 0, %s118
      %s135 = sphi 0, %s119
    $region4: #{tpu_custom_call.1} parent=1 // loop_header_branch
      %19 = sbr.rel (%p17) target = $region8
    $region5: #{tpu_custom_call.1} parent=1 // loop_body
      %s21 = ssub.s32 %s16, 1
      %s22 = ssub.s32 %s16, 2
      %s23 = sadd.s32 %s16, 1
      %s24 = ssub.s32 %s16, %s23
      %p25 = scmp.eq.s32.totalorder %s24, 0
      %s27 = sadd.s32 %s26, 1
      %s28 = scalar_select %p25, %s26, %s27
      %p31 = pneg %p25
      %p32 = scmp.eq.s32.totalorder %s16, 1
      %p33 = por %p31, %p32
      %p34 = scmp.ne.s32.totalorder %s26, %s29
      %p35 = scmp.eq.s32.totalorder %s16, 0
      %p36 = por %p34, %p35
      %p37 = scmp.ne.s32.totalorder %s26, %s29
      %p38 = scmp.eq.s32.totalorder %s21, 1
      %p39 = por %p37, %p38
      %p40 = scmp.ne.s32.totalorder %s29, %s30
      %p41 = scmp.eq.s32.totalorder %s21, 0
      %p42 = por %p40, %p41
      %p43 = scmp.ne.s32.totalorder %s29, %s30
      %p44 = scmp.eq.s32.totalorder %s22, 1
      %p45 = por %p43, %p44
      %p47 = scmp.ne.s32.totalorder %s30, %s46
      %p48 = scmp.eq.s32.totalorder %s22, 0
      %p49 = por %p47, %p48
      %s51 = sadd.s32 %s50, 1
      %p54 = scmp.eq.s32.totalorder %s16, 1
      %p55 = scmp.ne.s32.totalorder %s50, %s52
      %p56 = scmp.eq.s32.totalorder %s16, 0
      %p57 = por %p55, %p56
      %p58 = scmp.ne.s32.totalorder %s50, %s52
      %p59 = scmp.eq.s32.totalorder %s21, 1
      %p60 = por %p58, %p59
      %p61 = scmp.ne.s32.totalorder %s52, %s53
      %p62 = scmp.eq.s32.totalorder %s21, 0
      %p63 = por %p61, %p62
      %p64 = scmp.ne.s32.totalorder %s52, %s53
      %p65 = scmp.eq.s32.totalorder %s22, 1
      %p66 = por %p64, %p65
      %p68 = scmp.ne.s32.totalorder %s53, %s67
      %p69 = scmp.eq.s32.totalorder %s22, 0
      %p70 = por %p68, %p69
      %s72 = sadd.s32 %s71, 1
      %p75 = scmp.eq.s32.totalorder %s16, 1
      %p76 = scmp.ne.s32.totalorder %s71, %s73
      %p77 = scmp.eq.s32.totalorder %s16, 0
      %p78 = por %p76, %p77
      %p79 = scmp.ne.s32.totalorder %s71, %s73
      %p80 = scmp.eq.s32.totalorder %s21, 1
      %p81 = por %p79, %p80
      %p82 = scmp.ne.s32.totalorder %s73, %s74
      %p83 = scmp.eq.s32.totalorder %s21, 0
      %p84 = por %p82, %p83
      %p85 = scmp.ne.s32.totalorder %s73, %s74
      %p86 = scmp.eq.s32.totalorder %s22, 1
      %p87 = por %p85, %p86
      %p89 = scmp.ne.s32.totalorder %s74, %s88
      %p90 = scmp.eq.s32.totalorder %s22, 0
      %p91 = por %p89, %p90
      %s93 = sadd.s32 %s92, 1
      %p96 = scmp.eq.s32.totalorder %s16, 1
      %p97 = scmp.ne.s32.totalorder %s92, %s94
      %p98 = scmp.eq.s32.totalorder %s16, 0
      %p99 = por %p97, %p98
      %p100 = scmp.ne.s32.totalorder %s92, %s94
      %p101 = scmp.eq.s32.totalorder %s21, 1
      %p102 = por %p100, %p101
      %p103 = scmp.ne.s32.totalorder %s94, %s95
      %p104 = scmp.eq.s32.totalorder %s21, 0
      %p105 = por %p103, %p104
      %p106 = scmp.ne.s32.totalorder %s94, %s95
      %p107 = scmp.eq.s32.totalorder %s22, 1
      %p108 = por %p106, %p107
      %p110 = scmp.ne.s32.totalorder %s95, %s109
      %p111 = scmp.eq.s32.totalorder %s22, 0
      %p112 = por %p110, %p111
      %s113 = ssub.s32 %s16, %s23
      %p114 = scmp.eq.s32.totalorder %s113, 0
      %s116 = sadd.s32 %s115, 1
      %s117 = scalar_select %p114, %s115, %s116
      %p120 = pneg %p114
      %p121 = scmp.eq.s32.totalorder %s16, 1
      %p122 = por %p120, %p121
      %p123 = scmp.ne.s32.totalorder %s115, %s118
      %p124 = scmp.eq.s32.totalorder %s16, 0
      %p125 = por %p123, %p124
      %p126 = scmp.ne.s32.totalorder %s115, %s118
      %p127 = scmp.eq.s32.totalorder %s21, 1
      %p128 = por %p126, %p127
      %p129 = scmp.ne.s32.totalorder %s118, %s119
      %p130 = scmp.eq.s32.totalorder %s21, 0
      %p131 = por %p129, %p130
      %p132 = scmp.ne.s32.totalorder %s118, %s119
      %p133 = scmp.eq.s32.totalorder %s22, 1
      %p134 = por %p132, %p133
      %p136 = scmp.ne.s32.totalorder %s119, %s135
      %p137 = scmp.eq.s32.totalorder %s22, 0
      %p138 = por %p136, %p137
      %p139 = scmp.le.s32.totalorder 1, %s16
      %p140 = scmp.lt.s32.totalorder %s16, 3
      %p141 = pnand %p139, %p140
      %p142 = pneg %p141
      // Predicated region
      $region9: #{tpu_custom_call.1} parent=5 // pred_check
        _
      $region10: #{tpu_custom_call.1} parent=5 // pred_check_branch
        %144 = sbr.rel (%p141) target = $region12
      $region11: #{tpu_custom_call.1} parent=5 // pred_region
        %s145 = ssub.s32 %s16, 1
        // Predicated region
        $region13: #{tpu_custom_call.1} parent=11 // pred_check
          %p146 = pneg %p63
        $region14: #{tpu_custom_call.1} parent=11 // pred_check_branch
          %148 = sbr.rel (%p146) target = $region16
        $region15: #{tpu_custom_call.1} parent=11 // pred_region
          _
        $region16: #{tpu_custom_call.1} parent=11 // pred_fallthru
          _
        // Predicated region
        $region17: #{tpu_custom_call.1} parent=11 // pred_check
          %p149 = pneg %p84
        $region18: #{tpu_custom_call.1} parent=11 // pred_check_branch
          %151 = sbr.rel (%p149) target = $region20
        $region19: #{tpu_custom_call.1} parent=11 // pred_region
          _
        $region20: #{tpu_custom_call.1} parent=11 // pred_fallthru
          _
        // Predicated region
        $region21: #{tpu_custom_call.1} parent=11 // pred_check
          %p152 = pneg %p105
        $region22: #{tpu_custom_call.1} parent=11 // pred_check_branch
          %154 = sbr.rel (%p152) target = $region24
        $region23: #{tpu_custom_call.1} parent=11 // pred_region
          _
        $region24: #{tpu_custom_call.1} parent=11 // pred_fallthru
          _
      $region12: #{tpu_custom_call.1} parent=5 // pred_fallthru
        _
      %p155 = scmp.lt.s32.totalorder %s16, 2
      // Predicated region
      $region25: #{tpu_custom_call.1} parent=5 // pred_check
        %p156 = pneg %p155
      $region26: #{tpu_custom_call.1} parent=5 // pred_check_branch
        %158 = sbr.rel (%p156) target = $region28
      $region27: #{tpu_custom_call.1} parent=5 // pred_region
        // Predicated region
        $region29: #{tpu_custom_call.1} parent=27 // pred_check
          %p159 = pneg %p36
        $region30: #{tpu_custom_call.1} parent=27 // pred_check_branch
          %161 = sbr.rel (%p159) target = $region32
        $region31: #{tpu_custom_call.1} parent=27 // pred_region
          %s162 = sand.u32 %s26, 1
          %s163 = scalar_lea.sflag [#allocation3], %s162
          %s164 = sand.u32 %s26, 1
          %s165 = smul.addr %s164, 64
          %s166 = scalar_lea.vmem [#allocation2], %s165
          %s168 = ssub.s32 1024, 1024
          %169 = vsyncadd %s163, %s168
          %s170 = smul.addr %s16, 8
          %s171 = smul.addr %s170, 128
          %s172 = scalar_lea.hbm %s0, %s171
          %s173 = sshll.u32 %s166, 4
          %s174 = int_to_ptr.vmem [resolvable:$true] %s173
          %179 = dma.hbm_to_vmem [thread:$0]  %s172, 1024, %s174, %s163, 256, 256, 16
        $region32: #{tpu_custom_call.1} parent=27 // pred_fallthru
          _
      $region28: #{tpu_custom_call.1} parent=5 // pred_fallthru
        _
      %p180 = scmp.le.s32.totalorder 1, %s16
      %p181 = scmp.lt.s32.totalorder %s16, 3
      %p182 = pnand %p180, %p181
      %p183 = pneg %p182
      // Predicated region
      $region33: #{tpu_custom_call.1} parent=5 // pred_check
        _
      $region34: #{tpu_custom_call.1} parent=5 // pred_check_branch
        %185 = sbr.rel (%p182) target = $region36
      $region35: #{tpu_custom_call.1} parent=5 // pred_region
        %s186 = ssub.s32 %s16, 1
        %s187 = sand.u32 %s29, 1
        %s188 = scalar_lea.sflag [#allocation3], %s187
        %s189 = sand.u32 %s29, 1
        %s190 = smul.addr %s189, 64
        %s191 = scalar_lea.vmem [#allocation2], %s190
        // Predicated region
        $region37: #{tpu_custom_call.1} parent=35 // pred_check
          %p192 = pneg %p42
        $region38: #{tpu_custom_call.1} parent=35 // pred_check_branch
          %194 = sbr.rel (%p192) target = $region40
        $region39: #{tpu_custom_call.1} parent=35 // pred_region
          %195 = dma.done %s188, 1024
        $region40: #{tpu_custom_call.1} parent=35 // pred_fallthru
          _
        %s196 = sand.u32 %s29, 1
        %s197 = scalar_lea.sflag [#allocation3], %s196
        %s198 = sand.u32 %s29, 1
        %s199 = smul.addr %s198, 64
        %s200 = scalar_lea.vmem [#allocation2], %s199
        %p201 = pneg %p42
        %p202 = pneg %p39
        %p203 = pneg %p63
        %p204 = pneg %p60
        %p205 = pneg %p84
        %p206 = pneg %p81
        %p207 = pneg %p105
        %p208 = pneg %p102
        %p209 = pneg %p131
        %p210 = pneg %p128
        %s211 = sand.u32 %s118, 1
        %s212 = scalar_lea.sflag [#allocation4], %s211
        %s213 = sand.u32 %s118, 1
        %s214 = smul.addr %s213, 64
        %s215 = scalar_lea.vmem [#allocation5], %s214
        %v216 = vld [vmem:[%s191] sm:$0xff]
        %v217 = vld [vmem:[%s191 + $0x8] sm:$0xff]
        %v218 = vld [vmem:[%s191 + $0x10] sm:$0xff]
        %v219 = vld [vmem:[%s191 + $0x18] sm:$0xff]
        %v220 = vld [vmem:[%s191 + $0x20] sm:$0xff]
        %v221 = vld [vmem:[%s191 + $0x28] sm:$0xff]
        %v222 = vld [vmem:[%s191 + $0x30] sm:$0xff]
        %v223 = vld [vmem:[%s191 + $0x38] sm:$0xff]
        %v224 = vld [vmem:[%s1] sm:$0x1]
        %vm225 = vcmask 261120
        %v227 = vsel %vm225, %v224, 0
        %229 = vmatprep.subr.mxu0 0.0
        %230 = vmatpush1.msra.mxu0 0.0
        %231 = vmatprep.subr.mxu0 0.0
        %232 = vmatpush1.msra.mxu0 0.0
        %233 = vmatprep.subr.mxu0 0.0
        %234 = vmatpush1.msra.mxu0 0.0
        %235 = vmatprep.subr.mxu0 0.0
        %236 = vmatpush1.msra.mxu0 0.0
        %237 = vmatprep.subr.mxu0 0.0
        %238 = vmatpush1.msra.mxu0 0.0
        %239 = vmatprep.subr.mxu0 0.0
        %240 = vmatpush1.msra.mxu0 0.0
        %241 = vmatprep.subr.mxu0 0.0
        %242 = vmatpush1.msra.mxu0 0.0
        %243 = vmatprep.subr.mxu0 0.0
        %244 = vmatpush1.msra.mxu0 0.0
        %245 = vmatprep.subr.mxu0 0.0
        %246 = vmatpush1.msra.mxu0 0.0
        %247 = vmatprep.subr.mxu0 0.0
        %248 = vmatpush1.msra.mxu0 0.0
        %249 = vmatprep.subr.mxu0 0.0
        %250 = vmatpush1.msra.mxu0 0.0
        %251 = vmatprep.subr.mxu0 0.0
        %252 = vmatpush1.msra.mxu0 0.0
        %253 = vmatprep.subr.mxu0 %v223
        %254 = vmatpush1.msra.mxu0 %v222
        %255 = vmatprep.subr.mxu0 %v221
        %256 = vmatpush1.msra.mxu0 %v220
        %257 = vmatprep.subr.mxu0 %v219
        %258 = vmatpush1.msra.mxu0 %v218
        %259 = vmatprep.subr.mxu0 %v217
        %260 = vmatpush1.msra.mxu0 %v216
        %261 = vmatprep.subr.mxu0 0.0
        %262 = vmatpush2.msra.mxu0 0.0
        %263 = vmatprep.subr.mxu0 0.0
        %264 = vmatpush2.msra.mxu0 0.0
        %265 = vmatprep.subr.mxu0 0.0
        %266 = vmatpush2.msra.mxu0 0.0
        %267 = vmatprep.subr.mxu0 0.0
        %268 = vmatpush2.msra.mxu0 0.0
        %269 = vmatprep.subr.mxu0 0.0
        %270 = vmatpush2.msra.mxu0 0.0
        %271 = vmatprep.subr.mxu0 0.0
        %272 = vmatpush2.msra.mxu0 0.0
        %273 = vmatprep.subr.mxu0 0.0
        %274 = vmatpush2.msra.mxu0 0.0
        %275 = vmatprep.subr.mxu0 0.0
        %276 = vmatpush2.msra.mxu0 0.0
        %277 = vmatprep.subr.mxu0 0.0
        %278 = vmatpush2.msra.mxu0 0.0
        %279 = vmatprep.subr.mxu0 0.0
        %280 = vmatpush2.msra.mxu0 0.0
        %281 = vmatprep.subr.mxu0 0.0
        %282 = vmatpush2.msra.mxu0 0.0
        %283 = vmatprep.subr.mxu0 0.0
        %284 = vmatpush2.msra.mxu0 0.0
        %285 = vmatprep.subr.mxu0 0.0
        %286 = vmatpush2.msra.mxu0 0.0
        %287 = vmatprep.subr.mxu0 0.0
        %288 = vmatpush2.msra.mxu0 0.0
        %289 = vmatprep.subr.mxu0 0.0
        %290 = vmatpush2.msra.mxu0 0.0
        %291 = vmatprep.subr.mxu0 0.0
        %292 = vmatpush2.msra.mxu0 0.0
        %293 = vmatprep.mubr.f32.mxu0 0.0
        %294 = vmatmul.mubr.f32.gmra.mxu0 %v227
        %v295 = vpop.f32.mrf.mxu0
        %v296 = vadd.f32 0.0, %v295
        %v297 = vpop.f32.mrf.mxu0
        %v298 = vadd.f32 0.0, %v297
        %299 = vdwg.mxu0
        %vm300 = vcmask 1040384
        %v301 = vsel %vm300, %v296, -inf
        %v302 = vsel %vm300, %v298, -inf
        %v303 = vmax.f32 %v301, %v302
        %304 = vmax.xlane.f32.xlu0 %v303
        %v305 = vpop.xlane.xlu0 %304
        %v306 = vsub.f32 %v296, %v305
        %v307 = vsub.f32 %v298, %v305
        %v308 = vmul.f32 %v306, 1.442695
        %v309 = vpow.pop %v308
        %v310 = vmul.f32 %v307, 1.442695
        %v311 = vpow.pop %v310
        %v312 = vsel %vm300, %v309, 0.0
        %v313 = vsel %vm300, %v311, 0.0
        %v314 = vadd.f32 %v312, %v313
        %315 = vadd.xlane.f32.xlu0 %v314
        %v316 = vpop.xlane.xlu0 %315
        %v317 = vsel %vm300, %v309, 1.0
        %v318 = vsel %vm300, %v311, 1.0
        %319 = vmatprep.subr.mxu0 0.0
        %320 = vmatpush1.xpose.msra.mxu0 0.0
        %321 = vmatprep.subr.mxu0 0.0
        %322 = vmatpush1.xpose.msra.mxu0 0.0
        %323 = vmatprep.subr.mxu0 0.0
        %324 = vmatpush1.xpose.msra.mxu0 0.0
        %325 = vmatprep.subr.mxu0 0.0
        %326 = vmatpush1.xpose.msra.mxu0 0.0
        %327 = vmatprep.subr.mxu0 0.0
        %328 = vmatpush1.xpose.msra.mxu0 0.0
        %329 = vmatprep.subr.mxu0 0.0
        %330 = vmatpush1.xpose.msra.mxu0 0.0
        %331 = vmatprep.subr.mxu0 0.0
        %332 = vmatpush1.xpose.msra.mxu0 0.0
        %333 = vmatprep.subr.mxu0 0.0
        %334 = vmatpush1.xpose.msra.mxu0 0.0
        %335 = vmatprep.subr.mxu0 0.0
        %336 = vmatpush1.xpose.msra.mxu0 0.0
        %337 = vmatprep.subr.mxu0 0.0
        %338 = vmatpush1.xpose.msra.mxu0 0.0
        %339 = vmatprep.subr.mxu0 0.0
        %340 = vmatpush1.xpose.msra.mxu0 0.0
        %341 = vmatprep.subr.mxu0 0.0
        %342 = vmatpush1.xpose.msra.mxu0 0.0
        %343 = vmatprep.subr.mxu0 0.0
        %344 = vmatpush1.xpose.msra.mxu0 0.0
        %345 = vmatprep.subr.mxu0 0.0
        %346 = vmatpush1.xpose.msra.mxu0 0.0
        %347 = vmatprep.subr.mxu0 0.0
        %348 = vmatpush1.xpose.msra.mxu0 0.0
        %349 = vmatprep.subr.mxu0 %v318
        %350 = vmatpush1.xpose.msra.mxu0 %v317
        %351 = vmatprep.subr.mxu0 0.0
        %352 = vmatpush2.xpose.msra.mxu0 0.0
        %353 = vmatprep.subr.mxu0 0.0
        %354 = vmatpush2.xpose.msra.mxu0 0.0
        %355 = vmatprep.subr.mxu0 0.0
        %356 = vmatpush2.xpose.msra.mxu0 0.0
        %357 = vmatprep.subr.mxu0 0.0
        %358 = vmatpush2.xpose.msra.mxu0 0.0
        %359 = vmatprep.subr.mxu0 0.0
        %360 = vmatpush2.xpose.msra.mxu0 0.0
        %361 = vmatprep.subr.mxu0 0.0
        %362 = vmatpush2.xpose.msra.mxu0 0.0
        %363 = vmatprep.subr.mxu0 0.0
        %364 = vmatpush2.xpose.msra.mxu0 0.0
        %365 = vmatprep.subr.mxu0 0.0
        %366 = vmatpush2.xpose.msra.mxu0 0.0
        %367 = vmatprep.subr.mxu0 0.0
        %368 = vmatpush2.xpose.msra.mxu0 0.0
        %369 = vmatprep.subr.mxu0 0.0
        %370 = vmatpush2.xpose.msra.mxu0 0.0
        %371 = vmatprep.subr.mxu0 0.0
        %372 = vmatpush2.xpose.msra.mxu0 0.0
        %373 = vmatprep.subr.mxu0 0.0
        %374 = vmatpush2.xpose.msra.mxu0 0.0
        %375 = vmatprep.subr.mxu0 0.0
        %376 = vmatpush2.xpose.msra.mxu0 0.0
        %377 = vmatprep.subr.mxu0 0.0
        %378 = vmatpush2.xpose.msra.mxu0 0.0
        %379 = vmatprep.subr.mxu0 0.0
        %380 = vmatpush2.xpose.msra.mxu0 0.0
        %381 = vmatprep.subr.mxu0 0.0
        %382 = vmatpush2.xpose.msra.mxu0 0.0
        %383 = vmatprep.mubr.f32.mxu0 %v217
        %384 = vmatmul.mubr.f32.gmra.mxu0 %v216
        %v385 = vpop.f32.mrf.mxu0
        %v386 = vadd.f32 0.0, %v385
        %v387 = vpop.f32.mrf.mxu0
        %388 = vmatprep.mubr.f32.mxu0 %v219
        %389 = vmatmul.mubr.f32.gmra.mxu0 %v218
        %v390 = vpop.f32.mrf.mxu0
        %v391 = vadd.f32 0.0, %v390
        %v392 = vpop.f32.mrf.mxu0
        %393 = vmatprep.mubr.f32.mxu0 %v221
        %394 = vmatmul.mubr.f32.gmra.mxu0 %v220
        %v395 = vpop.f32.mrf.mxu0
        %v396 = vadd.f32 0.0, %v395
        %v397 = vpop.f32.mrf.mxu0
        %398 = vmatprep.mubr.f32.mxu0 %v223
        %399 = vmatmul.mubr.f32.gmra.mxu0 %v222
        %v400 = vpop.f32.mrf.mxu0
        %v401 = vadd.f32 0.0, %v400
        %v402 = vpop.f32.mrf.mxu0
        %403 = vdwg.mxu0
        %v404 = vmul.f32 %v216, %v216
        %v405 = vmul.f32 %v217, %v217
        %v406 = vmul.f32 %v218, %v218
        %v407 = vmul.f32 %v219, %v219
        %v408 = vmul.f32 %v220, %v220
        %v409 = vmul.f32 %v221, %v221
        %v410 = vmul.f32 %v222, %v222
        %v411 = vmul.f32 %v223, %v223
        %v412 = vadd.f32 %v404, %v405
        %413 = vadd.xlane.f32.xlu0 %v412
        %v414 = vpop.xlane.xlu0 %413
        %v415 = vadd.f32 %v406, %v407
        %416 = vadd.xlane.f32.xlu0 %v415
        %v417 = vpop.xlane.xlu0 %416
        %v418 = vadd.f32 %v408, %v409
        %419 = vadd.xlane.f32.xlu0 %v418
        %v420 = vpop.xlane.xlu0 %419
        %v421 = vadd.f32 %v410, %v411
        %422 = vadd.xlane.f32.xlu0 %v421
        %v423 = vpop.xlane.xlu0 %422
        %v424 = vlaneseq
        %v425 = vshrl.u32 %v424, 7
        %v426 = vsub.s32 0, %v425
        %v427 = vrot.slane %v316, %v426
        %v428 = vrcp.pop %v427
        %v429 = vmul.f32 %v386, %v428
        %v430 = vmul.f32 %v391, %v428
        %v431 = vmul.f32 %v396, %v428
        %v432 = vmul.f32 %v401, %v428
        %v433 = vmul.f32 %v386, 0.00390625
        %v434 = vmul.f32 %v391, 0.00390625
        %v435 = vmul.f32 %v396, 0.00390625
        %v436 = vmul.f32 %v401, 0.00390625
        %v437 = vmul.f32 %v414, 0.00390625
        %v438 = vmul.f32 %v417, 0.00390625
        %v439 = vmul.f32 %v420, 0.00390625
        %v440 = vmul.f32 %v423, 0.00390625
        %v441 = vmul.f32 %v433, %v433
        %v442 = vmul.f32 %v434, %v434
        %v443 = vmul.f32 %v435, %v435
        %v444 = vmul.f32 %v436, %v436
        %v445 = vsub.f32 %v437, %v441
        %v446 = vsub.f32 %v438, %v442
        %v447 = vsub.f32 %v439, %v443
        %v448 = vsub.f32 %v440, %v444
        %v449 = vmax.f32 %v445, 0.0
        %v450 = vmax.f32 %v446, 0.0
        %v451 = vmax.f32 %v447, 0.0
        %v452 = vmax.f32 %v448, 0.0
        %v453 = vadd.f32 %v449, 1e-05
        %v454 = vadd.f32 %v450, 1e-05
        %v455 = vadd.f32 %v451, 1e-05
        %v456 = vadd.f32 %v452, 1e-05
        %v457 = vrsqrt.pop %v453
        %v458 = vrsqrt.pop %v454
        %v459 = vrsqrt.pop %v455
        %v460 = vrsqrt.pop %v456
        %v461 = vld [vmem:[%s1 + $0x1] sm:$0x3]
        %v462 = vld [vmem:[%s3] sm:$0x3]
        %v464 = vsel %vm225, %v461, 0
        %466 = vmatprep.subr.mxu0 0.0
        %467 = vmatpush1.msra.mxu0 0.0
        %468 = vmatprep.subr.mxu0 0.0
        %469 = vmatpush1.msra.mxu0 0.0
        %470 = vmatprep.subr.mxu0 0.0
        %471 = vmatpush1.msra.mxu0 0.0
        %472 = vmatprep.subr.mxu0 0.0
        %473 = vmatpush1.msra.mxu0 0.0
        %474 = vmatprep.subr.mxu0 0.0
        %475 = vmatpush1.msra.mxu0 0.0
        %476 = vmatprep.subr.mxu0 0.0
        %477 = vmatpush1.msra.mxu0 0.0
        %478 = vmatprep.subr.mxu0 0.0
        %479 = vmatpush1.msra.mxu0 0.0
        %480 = vmatprep.subr.mxu0 0.0
        %481 = vmatpush1.msra.mxu0 0.0
        %482 = vmatprep.subr.mxu0 0.0
        %483 = vmatpush1.msra.mxu0 0.0
        %484 = vmatprep.subr.mxu0 0.0
        %485 = vmatpush1.msra.mxu0 0.0
        %486 = vmatprep.subr.mxu0 0.0
        %487 = vmatpush1.msra.mxu0 0.0
        %488 = vmatprep.subr.mxu0 0.0
        %489 = vmatpush1.msra.mxu0 0.0
        %490 = vmatprep.subr.mxu0 0.0
        %491 = vmatpush1.msra.mxu0 %v432
        %492 = vmatprep.subr.mxu0 0.0
        %493 = vmatpush1.msra.mxu0 %v431
        %494 = vmatprep.subr.mxu0 0.0
        %495 = vmatpush1.msra.mxu0 %v430
        %496 = vmatprep.subr.mxu0 0.0
        %497 = vmatpush1.msra.mxu0 %v429
        %498 = vmatprep.subr.mxu0 0.0
        %499 = vmatpush2.msra.mxu0 0.0
        %500 = vmatprep.subr.mxu0 0.0
        %501 = vmatpush2.msra.mxu0 0.0
        %502 = vmatprep.subr.mxu0 0.0
        %503 = vmatpush2.msra.mxu0 0.0
        %504 = vmatprep.subr.mxu0 0.0
        %505 = vmatpush2.msra.mxu0 0.0
        %506 = vmatprep.subr.mxu0 0.0
        %507 = vmatpush2.msra.mxu0 0.0
        %508 = vmatprep.subr.mxu0 0.0
        %509 = vmatpush2.msra.mxu0 0.0
        %510 = vmatprep.subr.mxu0 0.0
        %511 = vmatpush2.msra.mxu0 0.0
        %512 = vmatprep.subr.mxu0 0.0
        %513 = vmatpush2.msra.mxu0 0.0
        %514 = vmatprep.subr.mxu0 0.0
        %515 = vmatpush2.msra.mxu0 0.0
        %516 = vmatprep.subr.mxu0 0.0
        %517 = vmatpush2.msra.mxu0 0.0
        %518 = vmatprep.subr.mxu0 0.0
        %519 = vmatpush2.msra.mxu0 0.0
        %520 = vmatprep.subr.mxu0 0.0
        %521 = vmatpush2.msra.mxu0 0.0
        %522 = vmatprep.subr.mxu0 0.0
        %523 = vmatpush2.msra.mxu0 0.0
        %524 = vmatprep.subr.mxu0 0.0
        %525 = vmatpush2.msra.mxu0 0.0
        %526 = vmatprep.subr.mxu0 0.0
        %527 = vmatpush2.msra.mxu0 0.0
        %528 = vmatprep.subr.mxu0 0.0
        %529 = vmatpush2.msra.mxu0 0.0
        %530 = vmatprep.mubr.f32.mxu0 0.0
        %531 = vmatmul.mubr.f32.gmra.mxu0 %v464
        %v532 = vpop.f32.mrf.mxu0
        %v533 = vadd.f32 %v462, %v532
        %v534 = vpop.f32.mrf.mxu0
        %535 = vdwg.mxu0
        %vm536 = vcmask 1024
        %v537 = vsel %vm536, %v533, 0.0
        %538 = vadd.xlane.f32.xlu0 %v537
        %v539 = vpop.xlane.xlu0 %538
        %v540 = vrot.slane %v539, 4
        %v541 = vadd.f32 %v539, %v540
        %v542 = vrot.slane %v541, 2
        %v543 = vadd.f32 %v541, %v542
        %v544 = vrot.slane %v543, 1
        %v545 = vadd.f32 %v543, %v544
        %s546 = vtos %v545
        %v547 = vrcp.pop 2.0
        %s548 = vtos %v547
        %s549 = smul.f32 %s546, %s548
        %v550 = vmul.f32 %v533, %v533
        %v551 = vsel %vm536, %v550, 0.0
        %552 = vadd.xlane.f32.xlu0 %v551
        %v553 = vpop.xlane.xlu0 %552
        %v554 = vrot.slane %v553, 4
        %v555 = vadd.f32 %v553, %v554
        %v556 = vrot.slane %v555, 2
        %v557 = vadd.f32 %v555, %v556
        %v558 = vrot.slane %v557, 1
        %v559 = vadd.f32 %v557, %v558
        %s560 = vtos %v559
        %v561 = vrcp.pop 2.0
        %s562 = vtos %v561
        %s563 = smul.f32 %s560, %s562
        %s564 = smul.f32 %s549, %s549
        %s565 = ssub.f32 %s563, %s564
        %s566 = smax.f32 %s565, 0.0
        %v567 = vstv %s549
        %v568 = vsub.f32 %v533, %v567
        %s569 = sadd.f32 %s566, 1e-05
        %v570 = vstv %s569
        %v571 = vrsqrt.pop %v570
        %s572 = vtos %v571
        %v573 = vstv %s572
        %v574 = vmul.f32 %v568, %v573
        %576 = vrot.lane.b32.xlu0 %v462, 127
        %v577 = vpop.permute.xlu0 %576
        %v579 = vmul.f32 %v574, %v577
        %580 = vrot.lane.b32.xlu0 %v462, 126
        %v581 = vpop.permute.xlu0 %580
        %v583 = vadd.f32 %v579, %v581
        %v584 = vmax.f32 %v583, 0.0
        %v585 = vld [vmem:[%s2] sm:$0xff]
        %v586 = vld [vmem:[%s2 + $0x8] sm:$0xff]
        %v587 = vld [vmem:[%s2 + $0x10] sm:$0xff]
        %v588 = vld [vmem:[%s2 + $0x18] sm:$0xff]
        %593 = vrot.lane.b32.xlu0 %v585, 126
        %v594 = vpop.permute.xlu0 %593
        %595 = vrot.lane.b32.xlu0 %v586, 126
        %v596 = vpop.permute.xlu0 %595
        %597 = vrot.lane.b32.xlu0 %v587, 126
        %v598 = vpop.permute.xlu0 %597
        %599 = vrot.lane.b32.xlu0 %v588, 126
        %v600 = vpop.permute.xlu0 %599
        %vm605 = vcmask 15360
        %v606 = vsel %vm605, %v585, 0
        %v608 = vsel %vm605, %v586, 0
        %v610 = vsel %vm605, %v587, 0
        %v612 = vsel %vm605, %v588, 0
        %vm614 = vcmask 1041408
        %v616 = vsel %vm614, %v584, 0
        %618 = vmatprep.subr.mxu0 0.0
        %619 = vmatpush1.msra.mxu0 0.0
        %620 = vmatprep.subr.mxu0 0.0
        %621 = vmatpush1.msra.mxu0 0.0
        %622 = vmatprep.subr.mxu0 0.0
        %623 = vmatpush1.msra.mxu0 0.0
        %624 = vmatprep.subr.mxu0 0.0
        %625 = vmatpush1.msra.mxu0 0.0
        %626 = vmatprep.subr.mxu0 0.0
        %627 = vmatpush1.msra.mxu0 0.0
        %628 = vmatprep.subr.mxu0 0.0
        %629 = vmatpush1.msra.mxu0 0.0
        %630 = vmatprep.subr.mxu0 0.0
        %631 = vmatpush1.msra.mxu0 0.0
        %632 = vmatprep.subr.mxu0 0.0
        %633 = vmatpush1.msra.mxu0 0.0
        %634 = vmatprep.subr.mxu0 0.0
        %635 = vmatpush1.msra.mxu0 0.0
        %636 = vmatprep.subr.mxu0 0.0
        %637 = vmatpush1.msra.mxu0 0.0
        %638 = vmatprep.subr.mxu0 0.0
        %639 = vmatpush1.msra.mxu0 0.0
        %640 = vmatprep.subr.mxu0 0.0
        %641 = vmatpush1.msra.mxu0 0.0
        %642 = vmatprep.subr.mxu0 0.0
        %643 = vmatpush1.msra.mxu0 0.0
        %644 = vmatprep.subr.mxu0 0.0
        %645 = vmatpush1.msra.mxu0 0.0
        %646 = vmatprep.subr.mxu0 0.0
        %647 = vmatpush1.msra.mxu0 0.0
        %648 = vmatprep.subr.mxu0 0.0
        %649 = vmatpush1.msra.mxu0 %v616
        %650 = vmatprep.subr.mxu0 0.0
        %651 = vmatpush2.msra.mxu0 0.0
        %652 = vmatprep.subr.mxu0 0.0
        %653 = vmatpush2.msra.mxu0 0.0
        %654 = vmatprep.subr.mxu0 0.0
        %655 = vmatpush2.msra.mxu0 0.0
        %656 = vmatprep.subr.mxu0 0.0
        %657 = vmatpush2.msra.mxu0 0.0
        %658 = vmatprep.subr.mxu0 0.0
        %659 = vmatpush2.msra.mxu0 0.0
        %660 = vmatprep.subr.mxu0 0.0
        %661 = vmatpush2.msra.mxu0 0.0
        %662 = vmatprep.subr.mxu0 0.0
        %663 = vmatpush2.msra.mxu0 0.0
        %664 = vmatprep.subr.mxu0 0.0
        %665 = vmatpush2.msra.mxu0 0.0
        %666 = vmatprep.subr.mxu0 0.0
        %667 = vmatpush2.msra.mxu0 0.0
        %668 = vmatprep.subr.mxu0 0.0
        %669 = vmatpush2.msra.mxu0 0.0
        %670 = vmatprep.subr.mxu0 0.0
        %671 = vmatpush2.msra.mxu0 0.0
        %672 = vmatprep.subr.mxu0 0.0
        %673 = vmatpush2.msra.mxu0 0.0
        %674 = vmatprep.subr.mxu0 0.0
        %675 = vmatpush2.msra.mxu0 0.0
        %676 = vmatprep.subr.mxu0 0.0
        %677 = vmatpush2.msra.mxu0 0.0
        %678 = vmatprep.subr.mxu0 0.0
        %679 = vmatpush2.msra.mxu0 0.0
        %680 = vmatprep.subr.mxu0 0.0
        %681 = vmatpush2.msra.mxu0 0.0
        %682 = vmatprep.mubr.f32.mxu0 0.0
        %683 = vmatmul.mubr.f32.gmra.mxu0 %v606
        %v684 = vpop.f32.mrf.mxu0
        %v685 = vadd.f32 %v594, %v684
        %v686 = vpop.f32.mrf.mxu0
        %687 = vmatprep.mubr.f32.mxu0 0.0
        %688 = vmatmul.mubr.f32.gmra.mxu0 %v608
        %v689 = vpop.f32.mrf.mxu0
        %v690 = vadd.f32 %v596, %v689
        %v691 = vpop.f32.mrf.mxu0
        %692 = vmatprep.mubr.f32.mxu0 0.0
        %693 = vmatmul.mubr.f32.gmra.mxu0 %v610
        %v694 = vpop.f32.mrf.mxu0
        %v695 = vadd.f32 %v598, %v694
        %v696 = vpop.f32.mrf.mxu0
        %697 = vmatprep.mubr.f32.mxu0 0.0
        %698 = vmatmul.mubr.f32.gmra.mxu0 %v612
        %v699 = vpop.f32.mrf.mxu0
        %v700 = vadd.f32 %v600, %v699
        %v701 = vpop.f32.mrf.mxu0
        %702 = vdwg.mxu0
        %v703 = vxor.u32 %v685, 2147483648
        %v704 = vxor.u32 %v690, 2147483648
        %v705 = vxor.u32 %v695, 2147483648
        %v706 = vxor.u32 %v700, 2147483648
        %v707 = vmul.f32 %v703, 1.442695
        %v708 = vpow.pop %v707
        %v709 = vmul.f32 %v704, 1.442695
        %v710 = vpow.pop %v709
        %v711 = vmul.f32 %v705, 1.442695
        %v712 = vpow.pop %v711
        %v713 = vmul.f32 %v706, 1.442695
        %v714 = vpow.pop %v713
        %v715 = vadd.f32 %v708, 1.0
        %v716 = vadd.f32 %v710, 1.0
        %v717 = vadd.f32 %v712, 1.0
        %v718 = vadd.f32 %v714, 1.0
        %v719 = vrcp.pop %v715
        %v720 = vmul.f32 1.0, %v719
        %v721 = vrcp.pop %v716
        %v722 = vmul.f32 1.0, %v721
        %v723 = vrcp.pop %v717
        %v724 = vmul.f32 1.0, %v723
        %v725 = vrcp.pop %v718
        %v726 = vmul.f32 1.0, %v725
        %v727 = vsub.f32 1.0, %v720
        %v728 = vsub.f32 1.0, %v722
        %v729 = vsub.f32 1.0, %v724
        %v730 = vsub.f32 1.0, %v726
        %735 = vrot.lane.b32.xlu0 %v457, 127
        %v736 = vpop.permute.xlu0 %735
        %737 = vrot.lane.b32.xlu0 %v458, 127
        %v738 = vpop.permute.xlu0 %737
        %739 = vrot.lane.b32.xlu0 %v459, 127
        %v740 = vpop.permute.xlu0 %739
        %741 = vrot.lane.b32.xlu0 %v460, 127
        %v742 = vpop.permute.xlu0 %741
        %v747 = vmul.f32 %v727, %v736
        %v748 = vmul.f32 %v728, %v738
        %v749 = vmul.f32 %v729, %v740
        %v750 = vmul.f32 %v730, %v742
        %v751 = vadd.f32 %v720, %v747
        %v752 = vadd.f32 %v722, %v748
        %v753 = vadd.f32 %v724, %v749
        %v754 = vadd.f32 %v726, %v750
        %v755 = vsub.f32 0.0, %v747
        %v756 = vsub.f32 0.0, %v748
        %v757 = vsub.f32 0.0, %v749
        %v758 = vsub.f32 0.0, %v750
        %763 = vrot.lane.b32.xlu0 %v433, 127
        %v764 = vpop.permute.xlu0 %763
        %765 = vrot.lane.b32.xlu0 %v434, 127
        %v766 = vpop.permute.xlu0 %765
        %767 = vrot.lane.b32.xlu0 %v435, 127
        %v768 = vpop.permute.xlu0 %767
        %769 = vrot.lane.b32.xlu0 %v436, 127
        %v770 = vpop.permute.xlu0 %769
        %v775 = vmul.f32 %v755, %v764
        %v776 = vmul.f32 %v756, %v766
        %v777 = vmul.f32 %v757, %v768
        %v778 = vmul.f32 %v758, %v770
        %780 = vset.pattern.permute.xlu0 0
        %781 = vperm.xlu0 %780, %v751
        %v782 = vpop.permute.xlu0 %781
        %785 = vset.pattern.permute.xlu0 0
        %786 = vperm.xlu0 %785, %v752
        %v787 = vpop.permute.xlu0 %786
        %790 = vset.pattern.permute.xlu0 0
        %791 = vperm.xlu0 %790, %v753
        %v792 = vpop.permute.xlu0 %791
        %795 = vset.pattern.permute.xlu0 0
        %796 = vperm.xlu0 %795, %v754
        %v797 = vpop.permute.xlu0 %796
        %v799 = vmul.f32 %v216, %v782
        %v800 = vmul.f32 %v217, %v782
        %v801 = vmul.f32 %v218, %v787
        %v802 = vmul.f32 %v219, %v787
        %v803 = vmul.f32 %v220, %v792
        %v804 = vmul.f32 %v221, %v792
        %v805 = vmul.f32 %v222, %v797
        %v806 = vmul.f32 %v223, %v797
        %808 = vset.pattern.permute.xlu0 0
        %809 = vperm.xlu0 %808, %v775
        %v810 = vpop.permute.xlu0 %809
        %813 = vset.pattern.permute.xlu0 0
        %814 = vperm.xlu0 %813, %v776
        %v815 = vpop.permute.xlu0 %814
        %818 = vset.pattern.permute.xlu0 0
        %819 = vperm.xlu0 %818, %v777
        %v820 = vpop.permute.xlu0 %819
        %823 = vset.pattern.permute.xlu0 0
        %824 = vperm.xlu0 %823, %v778
        %v825 = vpop.permute.xlu0 %824
        %v827 = vadd.f32 %v799, %v810
        %v828 = vadd.f32 %v800, %v810
        %v829 = vadd.f32 %v801, %v815
        %v830 = vadd.f32 %v802, %v815
        %v831 = vadd.f32 %v803, %v820
        %v832 = vadd.f32 %v804, %v820
        %v833 = vadd.f32 %v805, %v825
        %v834 = vadd.f32 %v806, %v825
        %835 = vst [vmem:[%s215] sm:$0xff] %v827
        %836 = vst [vmem:[%s215 + $0x8] sm:$0xff] %v828
        %837 = vst [vmem:[%s215 + $0x10] sm:$0xff] %v829
        %838 = vst [vmem:[%s215 + $0x18] sm:$0xff] %v830
        %839 = vst [vmem:[%s215 + $0x20] sm:$0xff] %v831
        %840 = vst [vmem:[%s215 + $0x28] sm:$0xff] %v832
        %841 = vst [vmem:[%s215 + $0x30] sm:$0xff] %v833
        %842 = vst [vmem:[%s215 + $0x38] sm:$0xff] %v834
        %s843 = sand.u32 %s118, 1
        %s844 = scalar_lea.sflag [#allocation4], %s843
        %s845 = sand.u32 %s118, 1
        %s846 = smul.addr %s845, 64
        %s847 = scalar_lea.vmem [#allocation5], %s846
        // Predicated region
        $region41: #{tpu_custom_call.1} parent=35 // pred_check
          %p848 = pneg %p128
        $region42: #{tpu_custom_call.1} parent=35 // pred_check_branch
          %850 = sbr.rel (%p848) target = $region44
        $region43: #{tpu_custom_call.1} parent=35 // pred_region
          %s852 = ssub.s32 1024, 1024
          %853 = vsyncadd %s844, %s852
          %s854 = smul.addr %s21, 8
          %s855 = smul.addr %s854, 128
          %s856 = scalar_lea.hbm %s4, %s855
          %s857 = sshll.u32 %s847, 4
          %s858 = int_to_ptr.vmem [resolvable:$true] %s857
          %863 = dma.vmem_to_hbm [thread:$0]  %s858, 1024, %s856, %s844, 256, 256, 16
        $region44: #{tpu_custom_call.1} parent=35 // pred_fallthru
          _
      $region36: #{tpu_custom_call.1} parent=5 // pred_fallthru
        _
      %p864 = scmp.le.s32.totalorder 2, %s16
      // Predicated region
      $region45: #{tpu_custom_call.1} parent=5 // pred_check
        %p865 = pneg %p864
      $region46: #{tpu_custom_call.1} parent=5 // pred_check_branch
        %867 = sbr.rel (%p865) target = $region48
      $region47: #{tpu_custom_call.1} parent=5 // pred_region
        %s868 = ssub.s32 %s16, 2
        // Predicated region
        $region49: #{tpu_custom_call.1} parent=47 // pred_check
          %p869 = pneg %p134
        $region50: #{tpu_custom_call.1} parent=47 // pred_check_branch
          %871 = sbr.rel (%p869) target = $region52
        $region51: #{tpu_custom_call.1} parent=47 // pred_region
          %s872 = sand.u32 %s119, 1
          %s873 = scalar_lea.sflag [#allocation4], %s872
          %s874 = sand.u32 %s119, 1
          %s875 = smul.addr %s874, 64
          %s876 = scalar_lea.vmem [#allocation5], %s875
          %877 = dma.done %s873, 1024
        $region52: #{tpu_custom_call.1} parent=47 // pred_fallthru
          _
      $region48: #{tpu_custom_call.1} parent=5 // pred_fallthru
        _
    $region6: #{tpu_custom_call.1} parent=1 // loop_footer
      %s20 = sadd.s32 1, %s16
    $region7: #{tpu_custom_call.1} parent=1 // loop_footer_branch
      %15 = sbr.rel target = $region3
    $region8: #{tpu_custom_call.1} parent=1 // loop_exit
      _
    %878 = vsyncpa [#allocation3], 1
    %s879 = scalar_lea.sflag [#allocation3], 1
    %880 = vsyncpa %s879, 1
    %881 = vsyncpa [#allocation4], 1
    %s882 = scalar_lea.sflag [#allocation4], 1
    %883 = vsyncpa %s882, 1

</llo_original>
